<compile_context>
chip_gen: v7x
topology: tpu7x:2x2x1
jax: 0.10.0
libtpu: 0.0.40
codegen_flags: <defaults>
</compile_context>

<pallas_src>
import functools

import jax
import jax.numpy as jnp
from jax.experimental import pallas as pl
from jax.experimental.pallas import tpu as pltpu


_TARGET_BLOCK_BYTES = 2 * 1024 * 1024       # ~2 MiB of x per grid step (1-4 MiB sweet spot)
_RESIDENT_BIAS_MAX_BYTES = 2 * 1024 * 1024  # cap on lane-padded VMEM-resident bias copy
_MIN_VMEM_LIMIT = 16 * 1024 * 1024          # v5e scoped default
_MAX_VMEM_LIMIT = 32 * 1024 * 1024          # v7x scoped default (64 MiB physical)


def _sublane_multiple(itemsize: int) -> int:
    """Sublane granularity per dtype width (f32: 8, bf16: 16, int8/fp8: 32)."""
    return {4: 8, 2: 16, 1: 32}.get(itemsize, 8)


# ---------------------------------------------------------------------------
# Kernels
# ---------------------------------------------------------------------------

def _bias_resident_kernel(x_ref, b_ref, o_ref, *, tr, sub):
    """x_ref: (tr, S) block.  b_ref: full (R, 1) bias, VMEM-resident (fetched once)."""
    r0 = pl.multiple_of(pl.program_id(0) * tr, sub)
    o_ref[...] = x_ref[...] + b_ref[pl.ds(r0, tr), :]   # bias broadcasts over lanes


def _bias_tiled_kernel(x_ref, b_ref, o_ref):
    """x_ref: (tr, S) block.  b_ref: (tr, 1) per-row bias block (fallback path)."""
    o_ref[...] = x_ref[...] + b_ref[...]


# ---------------------------------------------------------------------------
# Tiling / scheduling helpers (all static, evaluated at trace time)
# ---------------------------------------------------------------------------

def _choose_row_tile(rows: int, lane: int, itemsize: int):
    """Row tile from a VMEM byte budget, rounded to the dtype sublane multiple."""
    sub = _sublane_multiple(itemsize)
    budget_rows = max(sub, (_TARGET_BLOCK_BYTES // max(1, lane * itemsize)) // sub * sub)
    if rows <= budget_rows:
        return rows, 1                       # single full-extent block (always legal)
    if rows % sub == 0:
        tr = budget_rows
        while rows % tr != 0:                # prefer an exact grid (no ragged boundary)
            tr -= sub
        if 2 * tr >= budget_rows:            # only if the divisor is near the budget
            return tr, rows // tr
    # Ragged grid: Pallas masks the partial last block (reads/writes past the
    # array bound are discarded); correctness is unaffected.
    return budget_rows, pl.cdiv(rows, budget_rows)


def _row_axis_semantics(num_blocks: int):
    """Best-effort: engage both TensorCores on multi-TC chips (v7x)."""
    if num_blocks < 2:
        return (pltpu.ARBITRARY,)
    try:
        info = pltpu.get_tpu_info()
        cores = max(int(getattr(info, "num_cores", 1) or 1),
                    int(getattr(info, "tensorcores_per_chip", 1) or 1))
        if cores >= 2:
            return (pltpu.CORE_PARALLEL,)
    except Exception:
        pass
    return (pltpu.PARALLEL,)


# ---------------------------------------------------------------------------
# Wrapper
# ---------------------------------------------------------------------------

@jax.jit
def learnable_bias_pallas(x_nchw, bias):
    """Forward of LearnableBias: out = x + bias, x: (N,C,H,W), bias: (1,C,1,1)."""
    N, C, H, W = x_nchw.shape
    dtype = x_nchw.dtype
    itemsize = jnp.dtype(dtype).itemsize
    R, S = N * C, H * W
    sub = _sublane_multiple(itemsize)

    # Metadata-only views of the contiguous NCHW buffer: rows = (n, c) pairs,
    # lanes = the flattened spatial extent each bias value broadcasts over.
    x2 = x_nchw.reshape(R, S)
    b2 = jnp.broadcast_to(bias.reshape(1, C), (N, C)).reshape(R, 1).astype(dtype)

    tr, num_blocks = _choose_row_tile(R, S, itemsize)
    ragged = (R % tr) != 0

    # Resident bias: one (R, 1) fetch for the whole grid instead of a 1-lane DMA
    # per step.  The resident copy is lane-padded in VMEM, so fall back to
    # per-tile bias blocks if it would be large, or if the grid is ragged
    # (in-kernel slicing must never run past the bias extent).
    bias_vmem_bytes = (-(-R // 8)) * 8 * 128 * itemsize
    resident = (not ragged) and bias_vmem_bytes <= _RESIDENT_BIAS_MAX_BYTES

    if resident:
        kernel = functools.partial(_bias_resident_kernel, tr=tr, sub=sub)
        b_spec = pl.BlockSpec((R, 1), lambda i: (0, 0))   # block index never changes
        bias_bufs = 1
    else:
        kernel = _bias_tiled_kernel
        b_spec = pl.BlockSpec((tr, 1), lambda i: (i, 0))
        bias_vmem_bytes = (-(-tr // 8)) * 8 * 128 * itemsize
        bias_bufs = 2

    # Explicit VMEM budget: 2x double-buffered input + 2x output tiles + bias,
    # with headroom; clamped so the request is valid on v5e/v6e/v7x alike.
    tile_bytes = tr * S * itemsize
    needed = 4 * tile_bytes + bias_bufs * bias_vmem_bytes + (1 << 20)
    vmem_limit = int(min(_MAX_VMEM_LIMIT, max(needed, _MIN_VMEM_LIMIT)))

    out = pl.pallas_call(
        kernel,
        out_shape=jax.ShapeDtypeStruct((R, S), dtype),
        grid=(num_blocks,),
        in_specs=[
            pl.BlockSpec((tr, S), lambda i: (i, 0)),
            b_spec,
        ],
        out_specs=pl.BlockSpec((tr, S), lambda i: (i, 0)),
        # In-place-able elementwise add: tile i of x is fully read before tile i
        # of out is written, so the HBM buffer can be aliased/donated.
        input_output_aliases={0: 0},
        compiler_params=pltpu.CompilerParams(
            dimension_semantics=_row_axis_semantics(num_blocks),
            vmem_limit_bytes=vmem_limit,
        ),
    )(x2, b2)

    return out.reshape(N, C, H, W)


# ---------------------------------------------------------------------------
# Pure-JAX reference (validation only)
# ---------------------------------------------------------------------------

def _learnable_bias_ref(x_nchw, bias):
    return x_nchw + bias        # (1, C, 1, 1) broadcasts over N, H, W


# ---------------------------------------------------------------------------

if __name__ == "__main__":
    key = jax.random.PRNGKey(0)
    N, C, H, W = 2, 4, 16, 16
    kx, kb = jax.random.split(key, 2)

    x = jax.random.normal(kx, (N, C, H, W), jnp.float32)
    # nn.Parameter is initialized to zeros; use a non-trivial value so the
    # validation actually exercises the broadcast-add.
    bias = 0.1 * jax.random.normal(kb, (1, C, 1, 1), jnp.float32)

    out = learnable_bias_pallas(x, bias)
    out = jax.block_until_ready(out)

    ref = _learnable_bias_ref(x, bias)
    assert out.shape == (N, C, H, W)
    assert jnp.allclose(out, ref, atol=1e-6, rtol=1e-6), \
        float(jnp.max(jnp.abs(out - ref)))
    print("KERNEL_OK")
</pallas_src>

<mosaic_0001>
module attributes {stable_mosaic.version = 11 : i64} {
  func.func @_bias_resident_kernel(%arg0: i32, %arg1: memref<8x256xf32, #tpu.memory_space<vmem>>, %arg2: memref<8x1xf32, #tpu.memory_space<vmem>>, %arg3: memref<8x256xf32, #tpu.memory_space<vmem>>) attributes {dimension_semantics = [#tpu.dimension_semantics<arbitrary>], iteration_bounds = array<i64: 1>, scalar_prefetch = 0 : i64, scratch_operands = 0 : i64, tpu.core_type = #tpu.core_type<tc>, window_params = [{transform_indices = @transform_0, window_bounds = array<i64: 8, 256>}, {pipeline_mode = #tpu.pipeline_mode<synchronous>, transform_indices = @transform_1, window_bounds = array<i64: 8, 1>}, {transform_indices = @transform_2, window_bounds = array<i64: 8, 256>}]} {
    %c8_i32 = arith.constant 8 : i32
    %0 = arith.muli %arg0, %c8_i32 : i32
    %1 = tpu.assume_multiple %0, 8 : i32
    %c0 = arith.constant 0 : index
    %c0_0 = arith.constant 0 : index
    %2 = vector.load %arg1[%c0, %c0_0] : memref<8x256xf32, #tpu.memory_space<vmem>>, vector<8x256xf32>
    %3 = arith.index_cast %1 : i32 to index
    %c0_1 = arith.constant 0 : index
    %4 = vector.load %arg2[%3, %c0_1] : memref<8x1xf32, #tpu.memory_space<vmem>>, vector<8x1xf32>
    %5 = vector.broadcast %4 : vector<8x1xf32> to vector<8x256xf32>
    %6 = arith.addf %2, %5 : vector<8x256xf32>
    %c0_2 = arith.constant 0 : index
    %c0_3 = arith.constant 0 : index
    %7 = vector.load %arg3[%c0_2, %c0_3] : memref<8x256xf32, #tpu.memory_space<vmem>>, vector<8x256xf32>
    tpu.vector_store %arg3[%c0_2, %c0_3], %6 {strides = array<i32>} : memref<8x256xf32, #tpu.memory_space<vmem>>, vector<8x256xf32>,
    return
  }
  func.func @transform_0(%arg0: i32) -> (i32, i32) {
    %c0_i32 = arith.constant 0 : i32
    %c0_i32_0 = arith.constant 0 : i32
    return %arg0, %c0_i32 : i32, i32
  }
  func.func @transform_1(%arg0: i32) -> (i32, i32) {
    %c0_i32 = arith.constant 0 : i32
    %c0_i32_0 = arith.constant 0 : i32
    %c0_i32_1 = arith.constant 0 : i32
    return %c0_i32, %c0_i32_0 : i32, i32
  }
  func.func @transform_2(%arg0: i32) -> (i32, i32) {
    %c0_i32 = arith.constant 0 : i32
    %c0_i32_0 = arith.constant 0 : i32
    return %arg0, %c0_i32 : i32, i32
  }
}

</mosaic_0001>

<llo_original>
// kernel: learnable_bias_pallas.1
$region0: #{learnable_bias_pallas.1}
  #allocation0 [shape = 'u32[]', space=smem, size = 0x4, offset = 0x4, fixed_abs, tag = 'smem constant byte address 0x4 - core index']
  #allocation1 [shape = 'u32[144,128]{1,0:T(1,128)}', space=vmem, size = 0x12000, scoped, tag = 'internal scratch']
  %s0 = inlined_call_operand.vmem [shape: f32[8,256], index: 0, kind: input, shape index: {}, may-alias: {0,2}]
  %s1 = inlined_call_operand.vmem [shape: f32[8,1], index: 1, kind: input, shape index: {}]
  %s2 = inlined_call_operand.vmem [shape: f32[8,256], index: 2, kind: output, shape index: {}, may-alias: {0,2}]
  %s3 = sld [smem:[#allocation0]]
  $region18: #{learnable_bias_pallas.1} parent=0
    _
  %s5 = ssub.s32 1, %s3
  %s6 = scalar_select 0, %s5, %s3
  // Predicated region
  $region2: #{learnable_bias_pallas.1} parent=0 // pred_check
    _
  $region3: #{learnable_bias_pallas.1} parent=0 // pred_check_branch
    %8 = sbr.rel (0) target = $region5
  $region4: #{learnable_bias_pallas.1} parent=0 // pred_region
    _
  $region5: #{learnable_bias_pallas.1} parent=0 // pred_fallthru
    _
  // Predicated region
  $region6: #{learnable_bias_pallas.1} parent=0 // pred_check
    _
  $region7: #{learnable_bias_pallas.1} parent=0 // pred_check_branch
    %10 = sbr.rel (0) target = $region9
  $region8: #{learnable_bias_pallas.1} parent=0 // pred_region
    _
  $region9: #{learnable_bias_pallas.1} parent=0 // pred_fallthru
    _
  %s11 = smul.u32 0, 8
  %v12 = vld [vmem:[%s0] sm:$0xff]
  %v13 = vld [vmem:[%s0 + $0x8] sm:$0xff]
  %s14 = scalar_lea.vmem %s1, %s11
  %v15 = vld [vmem:[%s14] sm:$0xff]
  %17 = vset.pattern.permute.xlu0 0
  %18 = vperm.xlu0 %17, %v15
  %v19 = vpop.permute.xlu0 %18
  %v21 = vadd.f32 %v12, %v19
  %v22 = vadd.f32 %v13, %v19
  %23 = vst [vmem:[%s2] sm:$0xff] %v21
  %24 = vst [vmem:[%s2 + $0x8] sm:$0xff] %v22
  // Predicated region
  $region10: #{learnable_bias_pallas.1} parent=0 // pred_check
    _
  $region11: #{learnable_bias_pallas.1} parent=0 // pred_check_branch
    %26 = sbr.rel (0) target = $region13
  $region12: #{learnable_bias_pallas.1} parent=0 // pred_region
    _
  $region13: #{learnable_bias_pallas.1} parent=0 // pred_fallthru
    _
  // Predicated region
  $region14: #{learnable_bias_pallas.1} parent=0 // pred_check
    _
  $region15: #{learnable_bias_pallas.1} parent=0 // pred_check_branch
    %28 = sbr.rel (0) target = $region17
  $region16: #{learnable_bias_pallas.1} parent=0 // pred_region
    _
  $region17: #{learnable_bias_pallas.1} parent=0 // pred_fallthru
    _

</llo_original>
